<compile_context>
chip_gen: v5e
topology: v5e:2x2
jax: 0.10.0
libtpu: 0.0.40
codegen_flags: <defaults>
</compile_context>

<pallas_src>
import functools

import jax
import jax.numpy as jnp
from jax.experimental import pallas as pl
from jax.experimental.pallas import tpu as pltpu

HIDDEN = 1024  # matches nn.Linear(1024, 1024) in the module


# ---------------------------------------------------------------------------
# Per-generation budgets
# ---------------------------------------------------------------------------
def _physical_vmem_bytes():
    try:
        return int(pltpu.get_tpu_info().vmem_capacity_bytes)
    except Exception:
        return 64 << 20  # conservative (v7x-sized) fallback


_PHYS_VMEM = _physical_vmem_bytes()
if _PHYS_VMEM >= (96 << 20):
    # v5e / v6e: 128 MiB VMEM per core -> bigger tiles, raised scoped limit.
    _VMEM_LIMIT = 64 << 20
    _TM_CAP_REDUCE = 1024
    _TM_CAP_SCALE = 2048
else:
    # v7x: 64 MiB physical / 32 MiB scoped default -> keep footprint well under.
    _VMEM_LIMIT = 28 << 20
    _TM_CAP_REDUCE = 1024
    _TM_CAP_SCALE = 1024

# Inputs at or below this size run as a single no-grid VMEM block.
_SMALL_BYTES = 4 << 20


# ---------------------------------------------------------------------------
# Tiling helpers
# ---------------------------------------------------------------------------
def _min_rows(dtype):
    itemsize = jnp.dtype(dtype).itemsize
    if itemsize >= 4:
        return 8        # f32/i32: native (8, 128) vreg tile
    if itemsize == 2:
        return 16       # bf16 packs 2 rows / sublane
    return 32           # int8 / fp8


def _pick_tiles(m, h, dtype, tm_cap):
    """Large, lane-dense tile.

    tn = full hidden (multiple of 128 -> unmasked packed stores); tm is the
    largest multiple of the sublane-packing row count that divides m, capped
    by tm_cap, preferring an even block count so v7x's two TensorCores get
    balanced work.  If the row-block count is still odd, split the hidden
    axis (tn = h/2) to add parallel grid points instead of shrinking tm.
    """
    rows = _min_rows(dtype)
    assert m % rows == 0, f"padded rows ({m}) must be a multiple of {rows}"
    assert h % 128 == 0, f"hidden ({h}) must be a multiple of 128"
    best, best_even = rows, None
    cand = rows
    limit = min(m, tm_cap)
    while cand <= limit:
        if m % cand == 0:
            best = cand
            if (m // cand) % 2 == 0:
                best_even = cand
        cand += rows
    tm = best
    if best_even is not None and best_even * 2 >= best:
        tm = best_even                      # balanced split, at most 2x smaller
    tn = h
    if (m // tm) % 2 == 1 and h % 256 == 0 and (h // 2) >= 512:
        tn = h // 2                         # add parallel points, stay lane-dense
    return tm, tn


def _pad_rows(x, axis, rows):
    m = x.shape[axis]
    pad = (-m) % rows
    if pad:
        widths = [(0, 0)] * x.ndim
        widths[axis] = (0, pad)
        x = jnp.pad(x, widths)
    return x, pad


# ---------------------------------------------------------------------------
# Kernel 1: identical-replica simulation (sum of tp identical copies == tp*x)
# ---------------------------------------------------------------------------
def _scale_kernel(x_ref, o_ref, *, scale, compute_dtype):
    x = x_ref[...].astype(compute_dtype)
    o_ref[...] = (x * jnp.asarray(scale, compute_dtype)).astype(o_ref.dtype)


# ---------------------------------------------------------------------------
# Kernel 2: genuine local reduction over stacked per-rank data [tp, m, h]
# (tp is the trailing 'arbitrary' grid axis; output block is resident)
# ---------------------------------------------------------------------------
def _reduce_kernel_inplace(x_ref, o_ref):
    # 32-bit output: accumulate directly into the resident output block
    # (no scratch, no final copy).
    k = pl.program_id(2)

    @pl.when(k == 0)
    def _():
        o_ref[...] = x_ref[...]

    @pl.when(k != 0)
    def _():
        o_ref[...] += x_ref[...]


def _reduce_kernel_acc(x_ref, o_ref, acc_ref):
    # Sub-32-bit output: accumulate in an f32 VMEM scratch, round once.
    k = pl.program_id(2)

    @pl.when(k == 0)
    def _():
        acc_ref[...] = x_ref[...].astype(jnp.float32)

    @pl.when(k != 0)
    def _():
        acc_ref[...] += x_ref[...].astype(jnp.float32)

    @pl.when(k == pl.num_programs(2) - 1)
    def _():
        o_ref[...] = acc_ref[...].astype(o_ref.dtype)


def _reduce_small_kernel(x_ref, o_ref):
    # Whole [tp, m, h] stack fits in VMEM: single-shot reduction, no grid.
    o_ref[...] = jnp.sum(x_ref[...].astype(jnp.float32), axis=0).astype(o_ref.dtype)


# ---------------------------------------------------------------------------
# Wrappers
# ---------------------------------------------------------------------------
def _scale_by_tp(x2d, tp, *, donate=False):
    m, h = x2d.shape
    dtype = x2d.dtype
    compute_dtype = dtype if jnp.issubdtype(dtype, jnp.floating) else jnp.int32
    kern = functools.partial(_scale_kernel, scale=tp, compute_dtype=compute_dtype)
    nbytes = m * h * jnp.dtype(dtype).itemsize

    if nbytes <= _SMALL_BYTES:
        # No-grid fast path: one full-array VMEM block, zero pipeline overhead.
        return pl.pallas_call(
            kern,
            out_shape=jax.ShapeDtypeStruct((m, h), dtype),
            in_specs=[pl.BlockSpec(memory_space=pltpu.MemorySpace.VMEM)],
            out_specs=pl.BlockSpec(memory_space=pltpu.MemorySpace.VMEM),
            compiler_params=pltpu.CompilerParams(vmem_limit_bytes=_VMEM_LIMIT),
            input_output_aliases=({0: 0} if donate else {}),
        )(x2d)

    rows = _min_rows(dtype)
    x2d_p, pad = _pad_rows(x2d, 0, rows)
    mp = m + pad
    tm, tn = _pick_tiles(mp, h, dtype, _TM_CAP_SCALE)
    out2d = pl.pallas_call(
        kern,
        out_shape=jax.ShapeDtypeStruct((mp, h), dtype),
        grid_spec=pltpu.PrefetchScalarGridSpec(
            num_scalar_prefetch=0,
            grid=(mp // tm, h // tn),
            in_specs=[pl.BlockSpec((tm, tn), lambda i, j: (i, j))],
            out_specs=pl.BlockSpec((tm, tn), lambda i, j: (i, j)),
        ),
        compiler_params=pltpu.CompilerParams(
            dimension_semantics=("parallel", "parallel"),
            vmem_limit_bytes=_VMEM_LIMIT,
        ),
        input_output_aliases=({0: 0} if donate else {}),
    )(x2d_p)
    if pad:
        out2d = out2d[:m]
    return out2d


def allreduce_sum_stacked(x_stacked):
    """Sum over the leading replica axis of x_stacked: [tp, batch, seq, hidden]."""
    tp, b, s, h = x_stacked.shape
    m = b * s
    dtype = x_stacked.dtype
    x3d = x_stacked.reshape(tp, m, h)
    if tp == 1:
        return x3d.reshape(b, s, h)

    nbytes = tp * m * h * jnp.dtype(dtype).itemsize
    if nbytes <= _SMALL_BYTES:
        out2d = pl.pallas_call(
            _reduce_small_kernel,
            out_shape=jax.ShapeDtypeStruct((m, h), dtype),
            in_specs=[pl.BlockSpec(memory_space=pltpu.MemorySpace.VMEM)],
            out_specs=pl.BlockSpec(memory_space=pltpu.MemorySpace.VMEM),
            compiler_params=pltpu.CompilerParams(vmem_limit_bytes=_VMEM_LIMIT),
        )(x3d)
        return out2d.reshape(b, s, h)

    rows = _min_rows(dtype)
    x3d_p, pad = _pad_rows(x3d, 1, rows)
    mp = m + pad
    tm, tn = _pick_tiles(mp, h, dtype, _TM_CAP_REDUCE)

    if jnp.dtype(dtype).itemsize >= 4:
        kernel = _reduce_kernel_inplace     # accumulate straight into o_ref
        scratch = []
    else:
        kernel = _reduce_kernel_acc         # f32 scratch, round once at the end
        scratch = [pltpu.VMEM((tm, tn), jnp.float32)]

    out2d = pl.pallas_call(
        kernel,
        out_shape=jax.ShapeDtypeStruct((mp, h), dtype),
        grid_spec=pltpu.PrefetchScalarGridSpec(
            num_scalar_prefetch=0,
            grid=(mp // tm, h // tn, tp),
            in_specs=[
                pl.BlockSpec((pl.Squeezed(), tm, tn), lambda i, j, k: (k, i, j)),
            ],
            out_specs=pl.BlockSpec((tm, tn), lambda i, j, k: (i, j)),
            scratch_shapes=scratch,
        ),
        compiler_params=pltpu.CompilerParams(
            dimension_semantics=("parallel", "parallel", "arbitrary"),
            vmem_limit_bytes=_VMEM_LIMIT,
        ),
    )(x3d_p)
    if pad:
        out2d = out2d[:m]
    return out2d.reshape(b, s, h)


# ---------------------------------------------------------------------------
# Forward pass of the module
# ---------------------------------------------------------------------------
def allreduce_block_forward(hidden_states, tp_world_size=1, *, donate=False):
    """Pallas implementation of allreduce_block.forward.

    hidden_states: [batch, seq, hidden].
    With a single-rank TP group (the reference's world_size==1 path) the
    forward is the identity, so the input is returned directly — no kernel,
    no HBM traffic, matching torch's all_reduce no-op.
    """
    if tp_world_size == 1:
        return hidden_states

    # Local single-device simulation of all_reduce over tp identical replicas:
    # sum == tp * x.  The input is read from HBM exactly once; the factor is
    # folded into the kernel (no broadcast materialization).
    # TODO(synk): a real multi-chip TP all-reduce needs a ring
    # reduce-scatter/all-gather with pltpu.make_async_remote_copy +
    # pltpu.get_barrier_semaphore and CompilerParams(collective_id=...).
    b, s, h = hidden_states.shape
    x2d = hidden_states.reshape(b * s, h)
    out2d = _scale_by_tp(x2d, tp_world_size, donate=donate)
    return out2d.reshape(b, s, h)


def init_params(key):
    """Deterministic init of the module's parameters (nn.Linear(1024, 1024)).

    NOTE: the Linear layer is never applied in forward() of the reference
    module; it is materialized only to mirror __init__.
    """
    kw, kb = jax.random.split(key)
    bound = 1.0 / jnp.sqrt(HIDDEN)
    weight = jax.random.uniform(kw, (HIDDEN, HIDDEN), jnp.float32, -bound, bound)
    bias = jax.random.uniform(kb, (HIDDEN,), jnp.float32, -bound, bound)
    return {"linear.weight": weight, "linear.bias": bias}


if __name__ == "__main__":
    key = jax.random.PRNGKey(0)
    k_params, k_x, k_big, k_r, k_rb, k_bf = jax.random.split(key, 6)

    params = init_params(k_params)  # built but unused in forward, per the reference

    # Small shapes consistent with the module: batch=2, seq=8, hidden=1024.
    x = jax.random.normal(k_x, (2, 8, HIDDEN), dtype=jnp.float32)

    # 1) world_size == 1: forward is the identity (kernel-free fast path).
    y1 = jax.block_until_ready(allreduce_block_forward(x, tp_world_size=1))
    assert y1.shape == x.shape and y1.dtype == x.dtype
    assert bool(jnp.array_equal(y1, x))

    # 2) simulated tp=4 group of identical replicas, small no-grid path.
    tp = 4
    y2 = jax.block_until_ready(allreduce_block_forward(x, tp_world_size=tp))
    assert y2.shape == x.shape and y2.dtype == x.dtype
    assert bool(jnp.allclose(y2, tp * x, rtol=1e-6, atol=1e-5))

    # 3) tp=4, tiled grid path + row padding (batch*seq = 1028, not /8).
    xb = jax.random.normal(k_big, (4, 257, HIDDEN), dtype=jnp.float32)
    y3 = jax.block_until_ready(allreduce_block_forward(xb, tp_world_size=tp))
    assert y3.shape == xb.shape and y3.dtype == xb.dtype
    assert bool(jnp.allclose(y3, tp * xb, rtol=1e-6, atol=1e-4))

    # 4) genuinely different per-rank tensors, small no-grid reduce path.
    xr = jax.random.normal(k_r, (tp, 2, 8, HIDDEN), dtype=jnp.float32)
    y4 = jax.block_until_ready(allreduce_sum_stacked(xr))
    assert bool(jnp.allclose(y4, jnp.sum(xr, axis=0), rtol=1e-6, atol=1e-4))

    # 5) stacked reduce, tiled grid path, f32 (direct accumulation into o_ref).
    xrb = jax.random.normal(k_rb, (tp, 2, 200, HIDDEN), dtype=jnp.float32)
    y5 = jax.block_until_ready(allreduce_sum_stacked(xrb))
    assert bool(jnp.allclose(y5, jnp.sum(xrb, axis=0), rtol=1e-6, atol=1e-4))

    # 6) stacked reduce, tiled grid path, bf16 (f32 scratch accumulator variant).
    xbf = jax.random.normal(k_bf, (tp, 2, 512, HIDDEN), dtype=jnp.float32).astype(
        jnp.bfloat16)
    y6 = jax.block_until_ready(allreduce_sum_stacked(xbf))
    ref6 = jnp.sum(xbf.astype(jnp.float32), axis=0)
    assert y6.dtype == jnp.bfloat16
    assert bool(jnp.allclose(y6.astype(jnp.float32), ref6, rtol=1e-2, atol=1e-2))

    print("KERNEL_OK")
</pallas_src>

<mosaic_0001>
module attributes {stable_mosaic.version = 11 : i64} {
  func.func @_scale_kernel(%arg0: memref<16x1024xf32, #tpu.memory_space<vmem>>, %arg1: memref<16x1024xf32, #tpu.memory_space<vmem>>) attributes {dimension_semantics = [], scalar_prefetch = 0 : i64, scratch_operands = 0 : i64, tpu.core_type = #tpu.core_type<tc>} {
    %c0 = arith.constant 0 : index
    %c0_0 = arith.constant 0 : index
    %0 = vector.load %arg0[%c0, %c0_0] : memref<16x1024xf32, #tpu.memory_space<vmem>>, vector<16x1024xf32>
    %cst = arith.constant 4.000000e+00 : f32
    %1 = vector.broadcast %cst : f32 to vector<16x1024xf32>
    %2 = arith.mulf %0, %1 : vector<16x1024xf32>
    %c0_1 = arith.constant 0 : index
    %c0_2 = arith.constant 0 : index
    %3 = vector.load %arg1[%c0_1, %c0_2] : memref<16x1024xf32, #tpu.memory_space<vmem>>, vector<16x1024xf32>
    tpu.vector_store %arg1[%c0_1, %c0_2], %2 {strides = array<i32>} : memref<16x1024xf32, #tpu.memory_space<vmem>>, vector<16x1024xf32>,
    return
  }
}

</mosaic_0001>

<llo_original>
// kernel: tpu_custom_call.1
$region0: #{tpu_custom_call.1}
  #allocation0 [shape = 'u32[]', space=smem, size = 0x4, offset = 0x4, fixed_abs, tag = 'smem constant byte address 0x4 - core index']
  #allocation1 [shape = 'u32[72,128]{1,0:T(1,128)}', space=vmem, size = 0x9000, scoped, tag = 'internal scratch']
  %s0 = inlined_call_operand.hbm [shape: f32[16,1024], index: 0, kind: input, shape index: {}]
  %s1 = inlined_call_operand.hbm [shape: f32[16,1024], index: 1, kind: output, shape index: {}]
  %s2 = sld [smem:[#allocation0]]
  $region18: #{tpu_custom_call.1} parent=0
    _
  %s4 = ssub.s32 1, %s2
  %s5 = scalar_select 0, %s4, %s2
  $region1: #{tpu_custom_call.1} parent=0
    #allocation2 [shape = 'u8[65536]{0}', space=vmem, size = 0x10000, scoped, tag = 'input window, operand 0, single buffered']
    #allocation3 [shape = 's32[1]{0}', space=sflag, size = 0x4, scoped, tag = 'scoped memory for tpu_custom_call.1']
    #allocation4 [shape = 's32[1]{0}', space=sflag, size = 0x4, scoped, tag = 'scoped memory for tpu_custom_call.1']
    #allocation5 [shape = 'u8[65536]{0}', space=vmem, size = 0x10000, scoped, tag = 'output window, operand 0, single buffered']
    %6 = vsyncpa [#allocation3], 0
    %7 = vsyncpa [#allocation4], 0
    // Predicated region
    $region2: #{tpu_custom_call.1} parent=1 // pred_check
      _
    $region3: #{tpu_custom_call.1} parent=1 // pred_check_branch
      %9 = sbr.rel (0) target = $region5
    $region4: #{tpu_custom_call.1} parent=1 // pred_region
      %11 = vsyncadd [#allocation3], 0
      %s12 = sshll.u32 %s0, 4
      %s13 = int_to_ptr.hbm [resolvable:$true] %s12
      %s14 = sshll.u32 [#allocation2], 4
      %s15 = int_to_ptr.vmem [resolvable:$true] %s14
      %20 = dma.hbm_to_vmem [thread:$0]  %s13, 2048, %s15, [#allocation3], 1024, 1024, 64
    $region5: #{tpu_custom_call.1} parent=1 // pred_fallthru
      _
    // Predicated region
    $region6: #{tpu_custom_call.1} parent=1 // pred_check
      _
    $region7: #{tpu_custom_call.1} parent=1 // pred_check_branch
      %22 = sbr.rel (0) target = $region9
    $region8: #{tpu_custom_call.1} parent=1 // pred_region
      %24 = dma.done [#allocation3], 2048
    $region9: #{tpu_custom_call.1} parent=1 // pred_fallthru
      _
    %v25 = vld [vmem:[#allocation2] sm:$0xff]
    %v26 = vld [vmem:[#allocation2 + $0x8] sm:$0xff]
    %v27 = vld [vmem:[#allocation2 + $0x10] sm:$0xff]
    %v28 = vld [vmem:[#allocation2 + $0x18] sm:$0xff]
    %v29 = vld [vmem:[#allocation2 + $0x20] sm:$0xff]
    %v30 = vld [vmem:[#allocation2 + $0x28] sm:$0xff]
    %v31 = vld [vmem:[#allocation2 + $0x30] sm:$0xff]
    %v32 = vld [vmem:[#allocation2 + $0x38] sm:$0xff]
    %v33 = vld [vmem:[#allocation2 + $0x40] sm:$0xff]
    %v34 = vld [vmem:[#allocation2 + $0x48] sm:$0xff]
    %v35 = vld [vmem:[#allocation2 + $0x50] sm:$0xff]
    %v36 = vld [vmem:[#allocation2 + $0x58] sm:$0xff]
    %v37 = vld [vmem:[#allocation2 + $0x60] sm:$0xff]
    %v38 = vld [vmem:[#allocation2 + $0x68] sm:$0xff]
    %v39 = vld [vmem:[#allocation2 + $0x70] sm:$0xff]
    %v40 = vld [vmem:[#allocation2 + $0x78] sm:$0xff]
    %v41 = vmul.f32 %v25, 4.0
    %v42 = vmul.f32 %v26, 4.0
    %v43 = vmul.f32 %v27, 4.0
    %v44 = vmul.f32 %v28, 4.0
    %v45 = vmul.f32 %v29, 4.0
    %v46 = vmul.f32 %v30, 4.0
    %v47 = vmul.f32 %v31, 4.0
    %v48 = vmul.f32 %v32, 4.0
    %v49 = vmul.f32 %v33, 4.0
    %v50 = vmul.f32 %v34, 4.0
    %v51 = vmul.f32 %v35, 4.0
    %v52 = vmul.f32 %v36, 4.0
    %v53 = vmul.f32 %v37, 4.0
    %v54 = vmul.f32 %v38, 4.0
    %v55 = vmul.f32 %v39, 4.0
    %v56 = vmul.f32 %v40, 4.0
    %57 = vst [vmem:[#allocation5] sm:$0xff] %v41
    %58 = vst [vmem:[#allocation5 + $0x8] sm:$0xff] %v42
    %59 = vst [vmem:[#allocation5 + $0x10] sm:$0xff] %v43
    %60 = vst [vmem:[#allocation5 + $0x18] sm:$0xff] %v44
    %61 = vst [vmem:[#allocation5 + $0x20] sm:$0xff] %v45
    %62 = vst [vmem:[#allocation5 + $0x28] sm:$0xff] %v46
    %63 = vst [vmem:[#allocation5 + $0x30] sm:$0xff] %v47
    %64 = vst [vmem:[#allocation5 + $0x38] sm:$0xff] %v48
    %65 = vst [vmem:[#allocation5 + $0x40] sm:$0xff] %v49
    %66 = vst [vmem:[#allocation5 + $0x48] sm:$0xff] %v50
    %67 = vst [vmem:[#allocation5 + $0x50] sm:$0xff] %v51
    %68 = vst [vmem:[#allocation5 + $0x58] sm:$0xff] %v52
    %69 = vst [vmem:[#allocation5 + $0x60] sm:$0xff] %v53
    %70 = vst [vmem:[#allocation5 + $0x68] sm:$0xff] %v54
    %71 = vst [vmem:[#allocation5 + $0x70] sm:$0xff] %v55
    %72 = vst [vmem:[#allocation5 + $0x78] sm:$0xff] %v56
    // Predicated region
    $region10: #{tpu_custom_call.1} parent=1 // pred_check
      _
    $region11: #{tpu_custom_call.1} parent=1 // pred_check_branch
      %74 = sbr.rel (0) target = $region13
    $region12: #{tpu_custom_call.1} parent=1 // pred_region
      %76 = vsyncadd [#allocation4], 0
      %s77 = sshll.u32 [#allocation5], 4
      %s78 = int_to_ptr.vmem [resolvable:$true] %s77
      %s79 = sshll.u32 %s1, 4
      %s80 = int_to_ptr.hbm [resolvable:$true] %s79
      %85 = dma.vmem_to_hbm [thread:$0]  %s78, 2048, %s80, [#allocation4], 1024, 1024, 64
    $region13: #{tpu_custom_call.1} parent=1 // pred_fallthru
      _
    // Predicated region
    $region14: #{tpu_custom_call.1} parent=1 // pred_check
      _
    $region15: #{tpu_custom_call.1} parent=1 // pred_check_branch
      %87 = sbr.rel (0) target = $region17
    $region16: #{tpu_custom_call.1} parent=1 // pred_region
      %89 = dma.done [#allocation4], 2048
    $region17: #{tpu_custom_call.1} parent=1 // pred_fallthru
      _
    %90 = vsyncpa [#allocation3], 1
    %91 = vsyncpa [#allocation4], 1

</llo_original>
